<compile_context>
chip_gen: v5e
topology: v5e:2x2
jax: 0.10.0
libtpu: 0.0.40
codegen_flags: <defaults>
</compile_context>

<pallas_src>
import math

import jax
import jax.numpy as jnp
from jax.experimental import pallas as pl
from jax.experimental.pallas import tpu as pltpu

_MiB = 1024 * 1024


def _round_up(x, m):
    return ((x + m - 1) // m) * m


def _gelu_tanh(x):
    # 0.5*x*(1 + tanh(c*(x + 0.044715 x^3))) == x * sigmoid(2c*(x + 0.044715 x^3))
    # tanh/sigmoid both hit the EUP slot; the identity drops the +1 and *0.5.
    k0 = 2.0 * math.sqrt(2.0 / math.pi)
    k1 = k0 * 0.044715
    x2 = x * x
    return x * jax.nn.sigmoid(x * (k0 + k1 * x2))


def _mlp_kernel_out_acc(x_ref, wfc_ref, bfc_ref, wproj_ref, bproj_ref, o_ref):
    """f32-output variant: accumulate directly into the resident output tile."""
    h_idx = pl.program_id(1)

    @pl.when(h_idx == 0)
    def _():
        o_ref[...] = jnp.zeros_like(o_ref)

    hpre = jnp.dot(x_ref[...], wfc_ref[...], preferred_element_type=jnp.float32)
    hpre = hpre + bfc_ref[...].astype(jnp.float32)            # (1, th) -> (tm, th)
    hact = _gelu_tanh(hpre)

    o_ref[...] += jnp.dot(hact.astype(wproj_ref.dtype), wproj_ref[...],
                          preferred_element_type=jnp.float32)

    @pl.when(h_idx == pl.num_programs(1) - 1)
    def _():
        o_ref[...] += bproj_ref[...].astype(jnp.float32)


def _mlp_kernel_scratch_acc(x_ref, wfc_ref, bfc_ref, wproj_ref, bproj_ref,
                            o_ref, acc_ref):
    """General variant: f32 scratch accumulator, cast to output dtype at the end."""
    h_idx = pl.program_id(1)

    @pl.when(h_idx == 0)
    def _():
        acc_ref[...] = jnp.zeros_like(acc_ref)

    hpre = jnp.dot(x_ref[...], wfc_ref[...], preferred_element_type=jnp.float32)
    hpre = hpre + bfc_ref[...].astype(jnp.float32)
    hact = _gelu_tanh(hpre)

    acc_ref[...] += jnp.dot(hact.astype(wproj_ref.dtype), wproj_ref[...],
                            preferred_element_type=jnp.float32)

    @pl.when(h_idx == pl.num_programs(1) - 1)
    def _():
        o_ref[...] = (acc_ref[...]
                      + bproj_ref[...].astype(jnp.float32)).astype(o_ref.dtype)


def _vmem_capacity_bytes():
    """Best-effort per-core VMEM capacity; conservative 64 MiB fallback (v7x)."""
    try:
        info = pltpu.get_tpu_info()
        cap = getattr(info, "vmem_capacity_bytes", None)
        if cap:
            return int(cap)
    except Exception:
        pass
    try:
        kind = jax.devices()[0].device_kind.lower()
        if "v5" in kind or "v6" in kind:
            return 128 * _MiB
    except Exception:
        pass
    return 64 * _MiB


def mlp_forward(x, w_fc, b_fc, w_proj, b_proj, *, tile_m=None, tile_h=None):
    """x: (B, T, C). w_fc: (C, 4C), b_fc: (4C,), w_proj: (4C, C), b_proj: (C,)."""
    B, T, C = x.shape
    Cin, H = w_fc.shape
    assert Cin == C and w_proj.shape == (H, C) and b_fc.shape == (H,) \
        and b_proj.shape == (C,)
    M = B * T

    isz = jnp.dtype(x.dtype).itemsize
    wsz = jnp.dtype(w_fc.dtype).itemsize
    osz = isz
    out_is_f32 = jnp.dtype(x.dtype) == jnp.dtype(jnp.float32)

    # ---- per-generation VMEM budget & tile targets -------------------------
    cap = _vmem_capacity_bytes()
    if cap >= 100 * _MiB:            # v5e / v6e (128 MiB parts)
        usable = 96 * _MiB
        tm_target, th_target = 1024, 512
    else:                            # v7x (64 MiB per TC): leave Mosaic headroom
        usable = 52 * _MiB
        tm_target, th_target = 512, 512

    def vmem_bytes(tm, th):
        est = (
            2 * tm * C * isz                 # x tile (double-buffered)
            + 2 * tm * C * osz               # out tile
            + 2 * C * th * wsz               # Wfc H-slice stream
            + 2 * th * C * wsz               # Wproj H-slice stream
            + 2 * (th + C) * 4               # bias slices
            + tm * th * (8 + wsz)            # hpre/hact f32 + cast copy for 2nd MXU pass
        )
        if not out_is_f32:
            est += tm * C * 4                # f32 accumulator scratch
        return est

    # ---- tile selection -----------------------------------------------------
    if tile_m is None:
        if M < 128:
            tile_m = max(8, _round_up(M, 8))
        else:
            tile_m = min(tm_target, _round_up(M, 128))
            if M >= 512:
                # Guarantee >= 2 row tiles so both v7x TensorCores get work.
                tile_m = min(tile_m, _round_up((M + 1) // 2, 128))
    if tile_h is None:
        tile_h = min(th_target, _round_up(H, 128))

    # Shrink until the working set fits: tile_h first (does not hurt
    # arithmetic intensity), then tile_m.
    while vmem_bytes(tile_m, tile_h) > usable:
        if tile_h > 256:
            tile_h //= 2
        elif tile_m > 128:
            tile_m = max(128, tile_m // 2)
        elif tile_h > 128:
            tile_h //= 2
        else:
            break

    # ---- pad to tile multiples (zero pads contribute exactly 0) ------------
    M_pad = _round_up(M, tile_m)
    H_pad = _round_up(H, tile_h)

    x2d = x.reshape(M, C)
    if M_pad != M:
        x2d = jnp.pad(x2d, ((0, M_pad - M), (0, 0)))
    wfc, bfc, wproj = w_fc, b_fc, w_proj
    if H_pad != H:
        wfc = jnp.pad(w_fc, ((0, 0), (0, H_pad - H)))
        bfc = jnp.pad(b_fc, (0, H_pad - H))
        wproj = jnp.pad(w_proj, ((0, H_pad - H), (0, 0)))
    bfc2d = bfc.reshape(1, H_pad)
    bproj2d = b_proj.reshape(1, C)

    n_m = M_pad // tile_m
    n_h = H_pad // tile_h

    # ---- advisory cost estimate for the XLA scheduler -----------------------
    cost = pl.CostEstimate(
        flops=4 * M_pad * C * H_pad,                              # two matmuls
        transcendentals=M_pad * H_pad,                            # sigmoid in GELU
        bytes_accessed=(2 * M_pad * C * isz                       # x in + y out
                        + n_m * 2 * C * H_pad * wsz               # weight re-streams
                        + n_m * (H_pad + C) * 4),                 # biases
    )

    if out_is_f32:
        kernel = _mlp_kernel_out_acc
        scratch_shapes = []
    else:
        kernel = _mlp_kernel_scratch_acc
        scratch_shapes = [pltpu.VMEM((tile_m, C), jnp.float32)]

    out2d = pl.pallas_call(
        kernel,
        out_shape=jax.ShapeDtypeStruct((M_pad, C), x.dtype),
        grid_spec=pltpu.PrefetchScalarGridSpec(
            num_scalar_prefetch=0,
            grid=(n_m, n_h),
            in_specs=[
                pl.BlockSpec((tile_m, C), lambda i, h: (i, 0)),    # x rows (resident over H)
                pl.BlockSpec((C, tile_h), lambda i, h: (0, h)),    # Wfc H-slice
                pl.BlockSpec((1, tile_h), lambda i, h: (0, h)),    # b_fc slice
                pl.BlockSpec((tile_h, C), lambda i, h: (h, 0)),    # Wproj H-slice
                pl.BlockSpec((1, C), lambda i, h: (0, 0)),         # b_proj
            ],
            out_specs=pl.BlockSpec((tile_m, C), lambda i, h: (i, 0)),
            scratch_shapes=scratch_shapes,
        ),
        compiler_params=pltpu.CompilerParams(
            dimension_semantics=("parallel", "arbitrary"),
            vmem_limit_bytes=int(usable),
        ),
        cost_estimate=cost,
    )(x2d, wfc, bfc2d, wproj, bproj2d)

    if M_pad != M:
        out2d = out2d[:M]
    return out2d.reshape(B, T, C)


if __name__ == "__main__":
    # Small config consistent with the module: n_embd=32, batch=2, seq=8.
    B, T, n_embd = 2, 8, 32
    H = 4 * n_embd

    key = jax.random.PRNGKey(0)
    kx, k1, k2, k3, k4 = jax.random.split(key, 5)

    x = jax.random.normal(kx, (B, T, n_embd), dtype=jnp.float32)

    # nn.Linear-style init (uniform +- 1/sqrt(fan_in)), stored pre-transposed
    # as (in_features, out_features).
    bound_fc = 1.0 / math.sqrt(n_embd)
    w_fc = jax.random.uniform(k1, (n_embd, H), jnp.float32, -bound_fc, bound_fc)
    b_fc = jax.random.uniform(k2, (H,), jnp.float32, -bound_fc, bound_fc)

    bound_pr = 1.0 / math.sqrt(H)
    w_proj = jax.random.uniform(k3, (H, n_embd), jnp.float32, -bound_pr, bound_pr)
    b_proj = jax.random.uniform(k4, (n_embd,), jnp.float32, -bound_pr, bound_pr)

    y = mlp_forward(x, w_fc, b_fc, w_proj, b_proj)
    jax.block_until_ready(y)

    # Reference check in plain JAX (tanh-approximate GELU, matching PyTorch).
    def ref(x):
        h = x @ w_fc + b_fc
        h = 0.5 * h * (1.0 + jnp.tanh(math.sqrt(2.0 / math.pi)
                                      * (h + 0.044715 * h ** 3)))
        return h @ w_proj + b_proj

    y_ref = ref(x)
    assert y.shape == (B, T, n_embd)
    assert jnp.allclose(y, y_ref, atol=2e-5, rtol=2e-5)

    print("KERNEL_OK")
</pallas_src>

<mosaic_0001>
module attributes {stable_mosaic.version = 11 : i64} {
  func.func @_mlp_kernel_out_acc(%arg0: i32, %arg1: i32, %arg2: memref<16x32xf32, #tpu.memory_space<vmem>>, %arg3: memref<32x128xf32, #tpu.memory_space<vmem>>, %arg4: memref<1x128xf32, #tpu.memory_space<vmem>>, %arg5: memref<128x32xf32, #tpu.memory_space<vmem>>, %arg6: memref<1x32xf32, #tpu.memory_space<vmem>>, %arg7: memref<16x32xf32, #tpu.memory_space<vmem>>) attributes {dimension_semantics = [#tpu.dimension_semantics<parallel>, #tpu.dimension_semantics<arbitrary>], iteration_bounds = array<i64: 1, 1>, scalar_prefetch = 0 : i64, scratch_operands = 0 : i64, tpu.core_type = #tpu.core_type<tc>, window_params = [{transform_indices = @transform_0, window_bounds = array<i64: 16, 32>}, {transform_indices = @transform_1, window_bounds = array<i64: 32, 128>}, {transform_indices = @transform_2, window_bounds = array<i64: 1, 128>}, {transform_indices = @transform_3, window_bounds = array<i64: 128, 32>}, {pipeline_mode = #tpu.pipeline_mode<synchronous>, transform_indices = @transform_4, window_bounds = array<i64: 1, 32>}, {transform_indices = @transform_5, window_bounds = array<i64: 16, 32>}]} {
    %c0_i32 = arith.constant 0 : i32
    %0 = arith.cmpi eq, %arg1, %c0_i32 : i32
    %1 = arith.extui %0 : i1 to i32
    %c0_i32_0 = arith.constant 0 : i32
    %2 = arith.cmpi ne, %1, %c0_i32_0 : i32
    scf.if %2 {
      %cst_18 = arith.constant 0.000000e+00 : f32
      %29 = vector.broadcast %cst_18 : f32 to vector<16x32xf32>
      %c0_19 = arith.constant 0 : index
      %c0_20 = arith.constant 0 : index
      %30 = vector.load %arg7[%c0_19, %c0_20] : memref<16x32xf32, #tpu.memory_space<vmem>>, vector<16x32xf32>
      tpu.vector_store %arg7[%c0_19, %c0_20], %29 {strides = array<i32>} : memref<16x32xf32, #tpu.memory_space<vmem>>, vector<16x32xf32>,
    } else {
    }
    %c0 = arith.constant 0 : index
    %c0_1 = arith.constant 0 : index
    %3 = vector.load %arg2[%c0, %c0_1] : memref<16x32xf32, #tpu.memory_space<vmem>>, vector<16x32xf32>
    %c0_2 = arith.constant 0 : index
    %c0_3 = arith.constant 0 : index
    %4 = vector.load %arg3[%c0_2, %c0_3] : memref<32x128xf32, #tpu.memory_space<vmem>>, vector<32x128xf32>
    %cst = arith.constant dense<0.000000e+00> : vector<16x128xf32>
    %5 = tpu.matmul %3, %4, %cst {dimension_numbers = #tpu.dot_dimension_numbers<[1], [0], [0], [1], [0, 0, 1, 1], [], []>} : vector<16x32xf32>, vector<32x128xf32>, vector<16x128xf32> -> vector<16x128xf32>
    %c0_4 = arith.constant 0 : index
    %c0_5 = arith.constant 0 : index
    %6 = vector.load %arg4[%c0_4, %c0_5] : memref<1x128xf32, #tpu.memory_space<vmem>>, vector<1x128xf32>
    %7 = vector.broadcast %6 : vector<1x128xf32> to vector<16x128xf32>
    %8 = arith.addf %5, %7 : vector<16x128xf32>
    %9 = arith.mulf %8, %8 : vector<16x128xf32>
    %cst_6 = arith.constant 0.0713548139 : f32
    %10 = vector.broadcast %cst_6 : f32 to vector<16x128xf32>
    %11 = arith.mulf %10, %9 : vector<16x128xf32>
    %cst_7 = arith.constant 1.59576917 : f32
    %12 = vector.broadcast %cst_7 : f32 to vector<16x128xf32>
    %13 = arith.addf %12, %11 : vector<16x128xf32>
    %14 = arith.mulf %8, %13 : vector<16x128xf32>
    %15 = arith.negf %14 : vector<16x128xf32>
    %16 = math.exp %15 : vector<16x128xf32>
    %cst_8 = arith.constant 1.000000e+00 : f32
    %17 = vector.broadcast %cst_8 : f32 to vector<16x128xf32>
    %18 = arith.addf %17, %16 : vector<16x128xf32>
    %19 = arith.divf %17, %18 : vector<16x128xf32>
    %20 = arith.mulf %8, %19 : vector<16x128xf32>
    %c0_9 = arith.constant 0 : index
    %c0_10 = arith.constant 0 : index
    %21 = vector.load %arg7[%c0_9, %c0_10] : memref<16x32xf32, #tpu.memory_space<vmem>>, vector<16x32xf32>
    %c0_11 = arith.constant 0 : index
    %c0_12 = arith.constant 0 : index
    %22 = vector.load %arg5[%c0_11, %c0_12] : memref<128x32xf32, #tpu.memory_space<vmem>>, vector<128x32xf32>
    %cst_13 = arith.constant dense<0.000000e+00> : vector<16x32xf32>
    %23 = tpu.matmul %20, %22, %cst_13 {dimension_numbers = #tpu.dot_dimension_numbers<[1], [0], [0], [1], [0, 0, 1, 1], [], []>} : vector<16x128xf32>, vector<128x32xf32>, vector<16x32xf32> -> vector<16x32xf32>
    %24 = arith.addf %21, %23 : vector<16x32xf32>
    %c0_14 = arith.constant 0 : index
    %c0_15 = arith.constant 0 : index
    %25 = vector.load %arg7[%c0_14, %c0_15] : memref<16x32xf32, #tpu.memory_space<vmem>>, vector<16x32xf32>
    tpu.vector_store %arg7[%c0_14, %c0_15], %24 {strides = array<i32>} : memref<16x32xf32, #tpu.memory_space<vmem>>, vector<16x32xf32>,
    %c0_i32_16 = arith.constant 0 : i32
    %26 = arith.cmpi eq, %arg1, %c0_i32_16 : i32
    %27 = arith.extui %26 : i1 to i32
    %c0_i32_17 = arith.constant 0 : i32
    %28 = arith.cmpi ne, %27, %c0_i32_17 : i32
    scf.if %28 {
      %c0_18 = arith.constant 0 : index
      %c0_19 = arith.constant 0 : index
      %29 = vector.load %arg7[%c0_18, %c0_19] : memref<16x32xf32, #tpu.memory_space<vmem>>, vector<16x32xf32>
      %c0_20 = arith.constant 0 : index
      %c0_21 = arith.constant 0 : index
      %30 = vector.load %arg6[%c0_20, %c0_21] : memref<1x32xf32, #tpu.memory_space<vmem>>, vector<1x32xf32>
      %31 = vector.broadcast %30 : vector<1x32xf32> to vector<16x32xf32>
      %32 = arith.addf %29, %31 : vector<16x32xf32>
      %c0_22 = arith.constant 0 : index
      %c0_23 = arith.constant 0 : index
      %33 = vector.load %arg7[%c0_22, %c0_23] : memref<16x32xf32, #tpu.memory_space<vmem>>, vector<16x32xf32>
      tpu.vector_store %arg7[%c0_22, %c0_23], %32 {strides = array<i32>} : memref<16x32xf32, #tpu.memory_space<vmem>>, vector<16x32xf32>,
    } else {
    }
    return
  }
  func.func @transform_0(%arg0: i32, %arg1: i32) -> (i32, i32) {
    %c0_i32 = arith.constant 0 : i32
    %c0_i32_0 = arith.constant 0 : i32
    return %arg0, %c0_i32 : i32, i32
  }
  func.func @transform_1(%arg0: i32, %arg1: i32) -> (i32, i32) {
    %c0_i32 = arith.constant 0 : i32
    %c0_i32_0 = arith.constant 0 : i32
    return %c0_i32, %arg1 : i32, i32
  }
  func.func @transform_2(%arg0: i32, %arg1: i32) -> (i32, i32) {
    %c0_i32 = arith.constant 0 : i32
    %c0_i32_0 = arith.constant 0 : i32
    return %c0_i32, %arg1 : i32, i32
  }
  func.func @transform_3(%arg0: i32, %arg1: i32) -> (i32, i32) {
    %c0_i32 = arith.constant 0 : i32
    %c0_i32_0 = arith.constant 0 : i32
    return %arg1, %c0_i32 : i32, i32
  }
  func.func @transform_4(%arg0: i32, %arg1: i32) -> (i32, i32) {
    %c0_i32 = arith.constant 0 : i32
    %c0_i32_0 = arith.constant 0 : i32
    %c0_i32_1 = arith.constant 0 : i32
    return %c0_i32, %c0_i32_0 : i32, i32
  }
  func.func @transform_5(%arg0: i32, %arg1: i32) -> (i32, i32) {
    %c0_i32 = arith.constant 0 : i32
    %c0_i32_0 = arith.constant 0 : i32
    return %arg0, %c0_i32 : i32, i32
  }
}

</mosaic_0001>

<llo_original>
// kernel: tpu_custom_call.1
$region0: #{tpu_custom_call.1}
  #allocation0 [shape = 'u32[]', space=smem, size = 0x4, offset = 0x4, fixed_abs, tag = 'smem constant byte address 0x4 - core index']
  #allocation1 [shape = 'u32[72,128]{1,0:T(1,128)}', space=vmem, size = 0x9000, scoped, tag = 'internal scratch']
  %s0 = inlined_call_operand.vmem [shape: f32[16,32], index: 0, kind: input, shape index: {}]
  %s1 = inlined_call_operand.vmem [shape: f32[32,128], index: 1, kind: input, shape index: {}]
  %s2 = inlined_call_operand.vmem [shape: f32[1,128], index: 2, kind: input, shape index: {}]
  %s3 = inlined_call_operand.vmem [shape: f32[128,32], index: 3, kind: input, shape index: {}]
  %s4 = inlined_call_operand.vmem [shape: f32[1,32], index: 4, kind: input, shape index: {}]
  %s5 = inlined_call_operand.hbm [shape: f32[16,32], index: 5, kind: output, shape index: {}]
  %s6 = sld [smem:[#allocation0]]
  $region38: #{tpu_custom_call.1} parent=0
    _
  %s8 = ssub.s32 1, %s6
  %s9 = scalar_select 0, %s8, %s6
  $region1: #{tpu_custom_call.1} parent=0
    #allocation2 [shape = 'u8[8192]{0}', space=vmem, size = 0x2000, scoped, tag = 'output window, operand 0, single buffered']
    #allocation3 [shape = 's32[1]{0}', space=sflag, size = 0x4, scoped, tag = 'scoped memory for tpu_custom_call.1']
    %10 = vsyncpa [#allocation3], 0
    // Predicated region
    $region2: #{tpu_custom_call.1} parent=1 // pred_check
      _
    $region3: #{tpu_custom_call.1} parent=1 // pred_check_branch
      %12 = sbr.rel (0) target = $region5
    $region4: #{tpu_custom_call.1} parent=1 // pred_region
      _
    $region5: #{tpu_custom_call.1} parent=1 // pred_fallthru
      _
    // Predicated region
    $region6: #{tpu_custom_call.1} parent=1 // pred_check
      _
    $region7: #{tpu_custom_call.1} parent=1 // pred_check_branch
      %14 = sbr.rel (0) target = $region9
    $region8: #{tpu_custom_call.1} parent=1 // pred_region
      _
    $region9: #{tpu_custom_call.1} parent=1 // pred_fallthru
      _
    // Predicated region
    $region10: #{tpu_custom_call.1} parent=1 // pred_check
      _
    $region11: #{tpu_custom_call.1} parent=1 // pred_check_branch
      %16 = sbr.rel (0) target = $region13
    $region12: #{tpu_custom_call.1} parent=1 // pred_region
      _
    $region13: #{tpu_custom_call.1} parent=1 // pred_fallthru
      _
    // Predicated region
    $region14: #{tpu_custom_call.1} parent=1 // pred_check
      _
    $region15: #{tpu_custom_call.1} parent=1 // pred_check_branch
      %18 = sbr.rel (0) target = $region17
    $region16: #{tpu_custom_call.1} parent=1 // pred_region
      _
    $region17: #{tpu_custom_call.1} parent=1 // pred_fallthru
      _
    // Predicated region
    $region18: #{tpu_custom_call.1} parent=1 // pred_check
      _
    $region19: #{tpu_custom_call.1} parent=1 // pred_check_branch
      %20 = sbr.rel (0) target = $region21
    $region20: #{tpu_custom_call.1} parent=1 // pred_region
      _
    $region21: #{tpu_custom_call.1} parent=1 // pred_fallthru
      _
    %p21 = scmp.eq.s32.totalorder 0, 0
    // Predicated region
    $region22: #{tpu_custom_call.1} parent=1 // pred_check
      %p22 = pneg %p21
    $region23: #{tpu_custom_call.1} parent=1 // pred_check_branch
      %24 = sbr.rel (%p22) target = $region25
    $region24: #{tpu_custom_call.1} parent=1 // pred_region
      %vm25 = vcmask 261120
      %26 = vst.msk [vmem:[#allocation2] sm:$0xff] %vm25, 0.0
      %27 = vst.msk [vmem:[#allocation2 + $0x8] sm:$0xff] %vm25, 0.0
    $region25: #{tpu_custom_call.1} parent=1 // pred_fallthru
      _
    %v28 = vld [vmem:[%s0] sm:$0xff]
    %v29 = vld [vmem:[%s0 + $0x8] sm:$0xff]
    %v30 = vld [vmem:[%s1] sm:$0xff]
    %v31 = vld [vmem:[%s1 + $0x8] sm:$0xff]
    %v32 = vld [vmem:[%s1 + $0x10] sm:$0xff]
    %v33 = vld [vmem:[%s1 + $0x18] sm:$0xff]
    %v34 = vld [vmem:[%s2] sm:$0x1]
    %v36 = vperm.slane %v34, 0
    %vm38 = vcmask 261120
    %v40 = vsel %vm38, %v28, 0
    %v43 = vsel %vm38, %v29, 0
    %45 = vmatpush.msra.mxu0 0.0
    %46 = vmatpush.msra.mxu0 0.0
    %47 = vmatpush.msra.mxu0 0.0
    %48 = vmatpush.msra.mxu0 0.0
    %49 = vmatpush.msra.mxu0 0.0
    %50 = vmatpush.msra.mxu0 0.0
    %51 = vmatpush.msra.mxu0 0.0
    %52 = vmatpush.msra.mxu0 0.0
    %53 = vmatpush.msra.mxu0 0.0
    %54 = vmatpush.msra.mxu0 0.0
    %55 = vmatpush.msra.mxu0 0.0
    %56 = vmatpush.msra.mxu0 0.0
    %57 = vmatpush.msra.mxu0 %v33
    %58 = vmatpush.msra.mxu0 %v32
    %59 = vmatpush.msra.mxu0 %v31
    %60 = vmatpush.msra.mxu0 %v30
    %61 = vmatmul.f32.gmra.mxu0 %v40
    %v62 = vpop.f32.mrf.mxu0
    %v63 = vadd.f32 %v36, %v62
    %64 = vmatmul.f32.gmra.mxu0 %v43
    %v65 = vpop.f32.mrf.mxu0
    %v66 = vadd.f32 %v36, %v65
    %67 = vdwg.mxu0
    %v68 = vmul.f32 %v63, %v63
    %v69 = vmul.f32 %v66, %v66
    %v70 = vmul.f32 %v68, 0.071354814
    %v71 = vmul.f32 %v69, 0.071354814
    %v72 = vadd.f32 %v70, 1.5957692
    %v73 = vadd.f32 %v71, 1.5957692
    %v74 = vmul.f32 %v63, %v72
    %v75 = vmul.f32 %v66, %v73
    %v76 = vxor.u32 %v74, 2147483648
    %v77 = vxor.u32 %v75, 2147483648
    %v78 = vmul.f32 %v76, 1.442695
    %v79 = vpow.pop %v78
    %v80 = vmul.f32 %v77, 1.442695
    %v81 = vpow.pop %v80
    %v82 = vadd.f32 %v79, 1.0
    %v83 = vadd.f32 %v81, 1.0
    %v84 = vrcp.pop %v82
    %v85 = vmul.f32 %v82, %v84
    %v86 = vsub.f32 1.0, %v85
    %v87 = vmul.f32 %v84, %v86
    %v88 = vadd.f32 %v84, %v87
    %vm89 = vweird.f32 %v82
    %vm90 = vweird.f32 %v84
    %vm91 = vmor %vm89, %vm90
    %v92 = vsel %vm91, %v84, %v88
    %v93 = vand.u32 2147483647, %v82
    %vm94 = vcmp.eq.f32.partialorder %v93, 8.507059e+37
    %v95 = vand.u32 %v82, 2147483648
    %v96 = vor.u32 1.1754944e-38, %v95
    %v97 = vsel %vm94, %v96, %v92
    %v98 = vmul.f32 1.0, %v97
    %v99 = vrcp.pop %v83
    %v100 = vmul.f32 %v83, %v99
    %v101 = vsub.f32 1.0, %v100
    %v102 = vmul.f32 %v99, %v101
    %v103 = vadd.f32 %v99, %v102
    %vm104 = vweird.f32 %v83
    %vm105 = vweird.f32 %v99
    %vm106 = vmor %vm104, %vm105
    %v107 = vsel %vm106, %v99, %v103
    %v108 = vand.u32 2147483647, %v83
    %vm109 = vcmp.eq.f32.partialorder %v108, 8.507059e+37
    %v110 = vand.u32 %v83, 2147483648
    %v111 = vor.u32 1.1754944e-38, %v110
    %v112 = vsel %vm109, %v111, %v107
    %v113 = vmul.f32 1.0, %v112
    %v114 = vmul.f32 %v63, %v98
    %v115 = vmul.f32 %v66, %v113
    %v116 = vld [vmem:[#allocation2] sm:$0xff]
    %v117 = vld [vmem:[#allocation2 + $0x8] sm:$0xff]
    %v118 = vld [vmem:[%s3] sm:$0xff]
    %v119 = vld [vmem:[%s3 + $0x8] sm:$0xff]
    %v120 = vld [vmem:[%s3 + $0x10] sm:$0xff]
    %v121 = vld [vmem:[%s3 + $0x18] sm:$0xff]
    %v122 = vld [vmem:[%s3 + $0x20] sm:$0xff]
    %v123 = vld [vmem:[%s3 + $0x28] sm:$0xff]
    %v124 = vld [vmem:[%s3 + $0x30] sm:$0xff]
    %v125 = vld [vmem:[%s3 + $0x38] sm:$0xff]
    %v126 = vld [vmem:[%s3 + $0x40] sm:$0xff]
    %v127 = vld [vmem:[%s3 + $0x48] sm:$0xff]
    %v128 = vld [vmem:[%s3 + $0x50] sm:$0xff]
    %v129 = vld [vmem:[%s3 + $0x58] sm:$0xff]
    %v130 = vld [vmem:[%s3 + $0x60] sm:$0xff]
    %v131 = vld [vmem:[%s3 + $0x68] sm:$0xff]
    %v132 = vld [vmem:[%s3 + $0x70] sm:$0xff]
    %v133 = vld [vmem:[%s3 + $0x78] sm:$0xff]
    %134 = vmatpush.msra.mxu0 %v133
    %135 = vmatpush.msra.mxu0 %v132
    %136 = vmatpush.msra.mxu0 %v131
    %137 = vmatpush.msra.mxu0 %v130
    %138 = vmatpush.msra.mxu0 %v129
    %139 = vmatpush.msra.mxu0 %v128
    %140 = vmatpush.msra.mxu0 %v127
    %141 = vmatpush.msra.mxu0 %v126
    %142 = vmatpush.msra.mxu0 %v125
    %143 = vmatpush.msra.mxu0 %v124
    %144 = vmatpush.msra.mxu0 %v123
    %145 = vmatpush.msra.mxu0 %v122
    %146 = vmatpush.msra.mxu0 %v121
    %147 = vmatpush.msra.mxu0 %v120
    %148 = vmatpush.msra.mxu0 %v119
    %149 = vmatpush.msra.mxu0 %v118
    %150 = vmatmul.f32.gmra.mxu0 %v114
    %v151 = vpop.f32.mrf.mxu0
    %v152 = vadd.f32 0.0, %v151
    %153 = vmatmul.f32.gmra.mxu0 %v115
    %v154 = vpop.f32.mrf.mxu0
    %v155 = vadd.f32 0.0, %v154
    %156 = vdwg.mxu0
    %v157 = vadd.f32 %v116, %v152
    %v158 = vadd.f32 %v117, %v155
    %159 = vst.msk [vmem:[#allocation2] sm:$0xff] %vm38, %v157
    %160 = vst.msk [vmem:[#allocation2 + $0x8] sm:$0xff] %vm38, %v158
    // Predicated region
    $region26: #{tpu_custom_call.1} parent=1 // pred_check
      %p161 = pneg %p21
    $region27: #{tpu_custom_call.1} parent=1 // pred_check_branch
      %163 = sbr.rel (%p161) target = $region29
    $region28: #{tpu_custom_call.1} parent=1 // pred_region
      %v164 = vld [vmem:[#allocation2] sm:$0xff]
      %v165 = vld [vmem:[#allocation2 + $0x8] sm:$0xff]
      %v166 = vld [vmem:[%s4] sm:$0x1]
      %v168 = vperm.slane %v166, 0
      %v170 = vadd.f32 %v164, %v168
      %v171 = vadd.f32 %v165, %v168
      %172 = vst.msk [vmem:[#allocation2] sm:$0xff] %vm38, %v170
      %173 = vst.msk [vmem:[#allocation2 + $0x8] sm:$0xff] %vm38, %v171
    $region29: #{tpu_custom_call.1} parent=1 // pred_fallthru
      _
    // Predicated region
    $region30: #{tpu_custom_call.1} parent=1 // pred_check
      _
    $region31: #{tpu_custom_call.1} parent=1 // pred_check_branch
      %175 = sbr.rel (0) target = $region33
    $region32: #{tpu_custom_call.1} parent=1 // pred_region
      %177 = vsyncadd [#allocation3], 0
      %s178 = sshll.u32 [#allocation2], 4
      %s179 = int_to_ptr.vmem [resolvable:$true] %s178
      %s180 = sshll.u32 %s5, 4
      %s181 = int_to_ptr.hbm [resolvable:$true] %s180
      %186 = dma.vmem_to_hbm [thread:$0]  %s179, 256, %s181, [#allocation3], 128, 128, 8
    $region33: #{tpu_custom_call.1} parent=1 // pred_fallthru
      _
    // Predicated region
    $region34: #{tpu_custom_call.1} parent=1 // pred_check
      _
    $region35: #{tpu_custom_call.1} parent=1 // pred_check_branch
      %188 = sbr.rel (0) target = $region37
    $region36: #{tpu_custom_call.1} parent=1 // pred_region
      %190 = dma.done [#allocation3], 256
    $region37: #{tpu_custom_call.1} parent=1 // pred_fallthru
      _
    %191 = vsyncpa [#allocation3], 1

</llo_original>
